<compile_context>
chip_gen: v7x
topology: tpu7x:2x2x1
jax: 0.10.0
libtpu: 0.0.40
codegen_flags: <defaults>
</compile_context>

<pallas_src>
import functools

import jax
import jax.numpy as jnp
import numpy as np
from jax import lax
from jax.experimental import pallas as pl
from jax.experimental.pallas import tpu as pltpu

BN_EPS = 1e-3
NEG = -1e30                       # finite "-inf"; every real group gets >=1 point
VMEM_LIMIT_BYTES = 48 * 1024 * 1024


def _round_up(x, m):
    return (x + m - 1) // m * m


# ----------------------------------------------------------------------------
# Pass 1: per-tile matmul + global sum / sum-of-squares accumulation (BN stats)
# ----------------------------------------------------------------------------
def _stats_kernel(x_ref, w_ref, sum_ref, sumsq_ref):
    @pl.when(pl.program_id(0) == 0)
    def _():
        sum_ref[...] = jnp.zeros_like(sum_ref)
        sumsq_ref[...] = jnp.zeros_like(sumsq_ref)

    h = jnp.dot(x_ref[...], w_ref[...], preferred_element_type=jnp.float32)
    # Padded rows of x are all-zero -> h == 0 there -> contribute nothing.
    sum_ref[...] += jnp.sum(h, axis=0, keepdims=True)
    sumsq_ref[...] += jnp.sum(h * h, axis=0, keepdims=True)


# ----------------------------------------------------------------------------
# Pass 2: BN (precomputed scale/shift) + Swish, lane-dense s store, and a
# row-wise scatter-max into the VMEM-resident (G_pad, U_pad) accumulator.
# unq_ref is the scalar-prefetched (n_pad,) int32 group index array in SMEM.
# ----------------------------------------------------------------------------
def _bn_swish_scatter_kernel(unq_ref, x_ref, w_ref, affine_ref, s_ref, gmax_ref,
                             *, tile_n):
    i = pl.program_id(0)

    @pl.when(i == 0)
    def _():
        gmax_ref[...] = jnp.full(gmax_ref.shape, NEG, gmax_ref.dtype)

    h = jnp.dot(x_ref[...], w_ref[...], preferred_element_type=jnp.float32)
    scale = affine_ref[0:1, :]
    shift = affine_ref[1:2, :]
    hb = h * scale + shift
    s = hb * jax.nn.sigmoid(hb)

    # Lane-dense full-width store of the activation tile.
    s_ref[...] = s.astype(s_ref.dtype)

    base = i * tile_n

    def body(r, carry):
        g = unq_ref[base + r]                                  # scalar read (SMEM)
        row = s_ref[pl.ds(r, 1), :]                            # (1, U_pad)
        cur = gmax_ref[pl.ds(g, 1), :]
        gmax_ref[pl.ds(g, 1), :] = jnp.maximum(cur, row)
        return carry

    lax.fori_loop(0, tile_n, body, 0)


# ----------------------------------------------------------------------------
# Wrapper
# ----------------------------------------------------------------------------
def pfn_layer_forward(inputs, unq_inv, weight, gamma, beta, *,
                      num_groups, last_layer=False, tile_n=512,
                      compute_dtype=jnp.float32):
    """inputs: (N, Cin); unq_inv: (N,) int; weight: (Cin, U) (torch weight.T)."""
    assert tile_n % 8 == 0, "tile_n must be a multiple of 8"
    n, cin = inputs.shape
    units = weight.shape[1]
    up = _round_up(max(units, 1), 128)          # lane-dense feature axis
    gp = _round_up(num_groups + 1, 8)           # +1 dedicated padding-group row
    n_pad = _round_up(max(n, 1), tile_n)
    n_tiles = n_pad // tile_n

    x = jnp.zeros((n_pad, cin), compute_dtype).at[:n].set(inputs.astype(compute_dtype))
    w = jnp.zeros((cin, up), compute_dtype).at[:, :units].set(weight.astype(compute_dtype))
    # Padded points route to the dedicated padding group (row num_groups).
    unq_pad = jnp.full((n_pad,), num_groups, jnp.int32).at[:n].set(
        unq_inv.astype(jnp.int32))

    params_arb = pltpu.CompilerParams(dimension_semantics=("arbitrary",),
                                      vmem_limit_bytes=VMEM_LIMIT_BYTES)

    # ---- Pass 1: BN batch statistics ----------------------------------------
    col_sum, col_sumsq = pl.pallas_call(
        _stats_kernel,
        grid=(n_tiles,),
        in_specs=[pl.BlockSpec((tile_n, cin), lambda i: (i, 0)),
                  pl.BlockSpec((cin, up), lambda i: (0, 0))],
        out_specs=[pl.BlockSpec((1, up), lambda i: (0, 0)),
                   pl.BlockSpec((1, up), lambda i: (0, 0))],
        out_shape=[jax.ShapeDtypeStruct((1, up), jnp.float32),
                   jax.ShapeDtypeStruct((1, up), jnp.float32)],
        compiler_params=params_arb,
    )(x, w)

    mean = col_sum[0] / n
    var = jnp.maximum(col_sumsq[0] / n - mean * mean, 0.0)
    gamma_p = jnp.zeros((up,), jnp.float32).at[:units].set(gamma.astype(jnp.float32))
    beta_p = jnp.zeros((up,), jnp.float32).at[:units].set(beta.astype(jnp.float32))
    scale = gamma_p * jax.lax.rsqrt(var + BN_EPS)
    shift = beta_p - mean * scale
    affine = jnp.zeros((8, up), jnp.float32).at[0].set(scale).at[1].set(shift)

    # ---- Pass 2: BN + Swish + scatter-max ------------------------------------
    s_pad, gmax = pl.pallas_call(
        functools.partial(_bn_swish_scatter_kernel, tile_n=tile_n),
        grid_spec=pltpu.PrefetchScalarGridSpec(
            num_scalar_prefetch=1,
            grid=(n_tiles,),
            in_specs=[pl.BlockSpec((tile_n, cin), lambda i, unq: (i, 0)),
                      pl.BlockSpec((cin, up), lambda i, unq: (0, 0)),
                      pl.BlockSpec((8, up), lambda i, unq: (0, 0))],
            out_specs=[pl.BlockSpec((tile_n, up), lambda i, unq: (i, 0)),
                       pl.BlockSpec((gp, up), lambda i, unq: (0, 0))]),
        out_shape=[jax.ShapeDtypeStruct((n_pad, up), jnp.float32),
                   jax.ShapeDtypeStruct((gp, up), jnp.float32)],
        compiler_params=params_arb,
    )(unq_pad, x, w, affine)

    # ---- Gather: x_max = feat_max[unq_inv] (plain XLA gather, O(N*U)) --------
    feat_max = gmax[:num_groups, :units]
    x_max = jnp.take(feat_max, unq_inv.astype(jnp.int32), axis=0)

    if last_layer:
        return x_max
    return jnp.concatenate([s_pad[:n, :units], x_max], axis=1)


# ----------------------------------------------------------------------------
# Pure-numpy reference (float64)
# ----------------------------------------------------------------------------
def _reference_np(inputs, unq_inv, weight, gamma, beta, num_groups, last_layer):
    x = np.asarray(inputs, np.float64)
    w = np.asarray(weight, np.float64)
    h = x @ w
    mean = h.mean(axis=0, keepdims=True)
    var = ((h - mean) ** 2).mean(axis=0, keepdims=True)           # biased (training BN)
    hn = (h - mean) / np.sqrt(var + BN_EPS)
    hn = hn * np.asarray(gamma, np.float64)[None, :] + np.asarray(beta, np.float64)[None, :]
    s = hn * (1.0 / (1.0 + np.exp(-hn)))                          # Swish
    ui = np.asarray(unq_inv)
    feat_max = np.full((num_groups, s.shape[1]), -np.inf)
    for i in range(x.shape[0]):
        feat_max[ui[i]] = np.maximum(feat_max[ui[i]], s[i])
    x_max = feat_max[ui]
    return x_max if last_layer else np.concatenate([s, x_max], axis=1)


if __name__ == "__main__":
    # PFNLayer(in_channels=10, out_channels=32, last_layer=False) -> units = 16
    N, C_IN, OUT_CHANNELS, NUM_GROUPS = 200, 10, 32, 12
    UNITS = OUT_CHANNELS // 2

    key = jax.random.PRNGKey(0)
    k_x, k_w, k_g, k_b, k_u = jax.random.split(key, 5)

    inputs = jax.random.normal(k_x, (N, C_IN), dtype=jnp.float32)
    weight = jax.random.normal(k_w, (C_IN, UNITS), dtype=jnp.float32) * 0.1
    gamma = 1.0 + 0.1 * jax.random.normal(k_g, (UNITS,), dtype=jnp.float32)
    beta = 0.1 * jax.random.normal(k_b, (UNITS,), dtype=jnp.float32)
    unq_inv = jax.random.randint(k_u, (N,), 0, NUM_GROUPS, dtype=jnp.int32)
    # Guarantee every group id appears at least once (matches unique-inverse usage).
    unq_inv = unq_inv.at[:NUM_GROUPS].set(jnp.arange(NUM_GROUPS, dtype=jnp.int32))

    # Small tile so the demo exercises multi-tile accumulation (2 grid steps).
    out = pfn_layer_forward(inputs, unq_inv, weight, gamma, beta,
                            num_groups=NUM_GROUPS, last_layer=False, tile_n=128)
    out = jax.block_until_ready(out)
    ref = _reference_np(inputs, unq_inv, weight, gamma, beta, NUM_GROUPS, False)
    np.testing.assert_allclose(np.asarray(out), ref, rtol=1e-4, atol=1e-4)

    out_last = pfn_layer_forward(inputs, unq_inv, weight, gamma, beta,
                                 num_groups=NUM_GROUPS, last_layer=True, tile_n=128)
    out_last = jax.block_until_ready(out_last)
    ref_last = _reference_np(inputs, unq_inv, weight, gamma, beta, NUM_GROUPS, True)
    np.testing.assert_allclose(np.asarray(out_last), ref_last, rtol=1e-4, atol=1e-4)

    print("KERNEL_OK")
</pallas_src>

<mosaic_0001>
module attributes {stable_mosaic.version = 11 : i64} {
  func.func @_stats_kernel(%arg0: i32, %arg1: memref<128x10xf32, #tpu.memory_space<vmem>>, %arg2: memref<10x128xf32, #tpu.memory_space<vmem>>, %arg3: memref<1x128xf32, #tpu.memory_space<vmem>>, %arg4: memref<1x128xf32, #tpu.memory_space<vmem>>) attributes {dimension_semantics = [#tpu.dimension_semantics<arbitrary>], iteration_bounds = array<i64: 2>, scalar_prefetch = 0 : i64, scratch_operands = 0 : i64, tpu.core_type = #tpu.core_type<tc>, window_params = [{transform_indices = @transform_0, window_bounds = array<i64: 128, 10>}, {pipeline_mode = #tpu.pipeline_mode<synchronous>, transform_indices = @transform_1, window_bounds = array<i64: 10, 128>}, {pipeline_mode = #tpu.pipeline_mode<synchronous>, transform_indices = @transform_2, window_bounds = array<i64: 1, 128>}, {pipeline_mode = #tpu.pipeline_mode<synchronous>, transform_indices = @transform_3, window_bounds = array<i64: 1, 128>}]} {
    %c0_i32 = arith.constant 0 : i32
    %0 = arith.cmpi eq, %arg0, %c0_i32 : i32
    %1 = arith.extui %0 : i1 to i32
    %c0_i32_0 = arith.constant 0 : i32
    %2 = arith.cmpi ne, %1, %c0_i32_0 : i32
    scf.if %2 {
      %cst_14 = arith.constant 0.000000e+00 : f32
      %17 = vector.broadcast %cst_14 : f32 to vector<1x128xf32>
      %c0_15 = arith.constant 0 : index
      %c0_16 = arith.constant 0 : index
      %18 = vector.load %arg3[%c0_15, %c0_16] : memref<1x128xf32, #tpu.memory_space<vmem>>, vector<1x128xf32>
      tpu.vector_store %arg3[%c0_15, %c0_16], %17 {strides = array<i32>} : memref<1x128xf32, #tpu.memory_space<vmem>>, vector<1x128xf32>,
      %cst_17 = arith.constant 0.000000e+00 : f32
      %19 = vector.broadcast %cst_17 : f32 to vector<1x128xf32>
      %c0_18 = arith.constant 0 : index
      %c0_19 = arith.constant 0 : index
      %20 = vector.load %arg4[%c0_18, %c0_19] : memref<1x128xf32, #tpu.memory_space<vmem>>, vector<1x128xf32>
      tpu.vector_store %arg4[%c0_18, %c0_19], %19 {strides = array<i32>} : memref<1x128xf32, #tpu.memory_space<vmem>>, vector<1x128xf32>,
    } else {
    }
    %c0 = arith.constant 0 : index
    %c0_1 = arith.constant 0 : index
    %3 = vector.load %arg1[%c0, %c0_1] : memref<128x10xf32, #tpu.memory_space<vmem>>, vector<128x10xf32>
    %c0_2 = arith.constant 0 : index
    %c0_3 = arith.constant 0 : index
    %4 = vector.load %arg2[%c0_2, %c0_3] : memref<10x128xf32, #tpu.memory_space<vmem>>, vector<10x128xf32>
    %cst = arith.constant dense<0.000000e+00> : vector<128x128xf32>
    %5 = tpu.matmul %3, %4, %cst {dimension_numbers = #tpu.dot_dimension_numbers<[1], [0], [0], [1], [0, 0, 1, 1], [], []>} : vector<128x10xf32>, vector<10x128xf32>, vector<128x128xf32> -> vector<128x128xf32>
    %c0_4 = arith.constant 0 : index
    %c0_5 = arith.constant 0 : index
    %6 = vector.load %arg3[%c0_4, %c0_5] : memref<1x128xf32, #tpu.memory_space<vmem>>, vector<1x128xf32>
    %cst_6 = arith.constant dense<0.000000e+00> : vector<128xf32>
    %7 = vector.multi_reduction <add>, %5, %cst_6 [0] : vector<128x128xf32> to vector<128xf32>
    %8 = vector.shape_cast %7 : vector<128xf32> to vector<1x128xf32>
    %9 = arith.addf %6, %8 : vector<1x128xf32>
    %c0_7 = arith.constant 0 : index
    %c0_8 = arith.constant 0 : index
    %10 = vector.load %arg3[%c0_7, %c0_8] : memref<1x128xf32, #tpu.memory_space<vmem>>, vector<1x128xf32>
    tpu.vector_store %arg3[%c0_7, %c0_8], %9 {strides = array<i32>} : memref<1x128xf32, #tpu.memory_space<vmem>>, vector<1x128xf32>,
    %c0_9 = arith.constant 0 : index
    %c0_10 = arith.constant 0 : index
    %11 = vector.load %arg4[%c0_9, %c0_10] : memref<1x128xf32, #tpu.memory_space<vmem>>, vector<1x128xf32>
    %12 = arith.mulf %5, %5 : vector<128x128xf32>
    %cst_11 = arith.constant dense<0.000000e+00> : vector<128xf32>
    %13 = vector.multi_reduction <add>, %12, %cst_11 [0] : vector<128x128xf32> to vector<128xf32>
    %14 = vector.shape_cast %13 : vector<128xf32> to vector<1x128xf32>
    %15 = arith.addf %11, %14 : vector<1x128xf32>
    %c0_12 = arith.constant 0 : index
    %c0_13 = arith.constant 0 : index
    %16 = vector.load %arg4[%c0_12, %c0_13] : memref<1x128xf32, #tpu.memory_space<vmem>>, vector<1x128xf32>
    tpu.vector_store %arg4[%c0_12, %c0_13], %15 {strides = array<i32>} : memref<1x128xf32, #tpu.memory_space<vmem>>, vector<1x128xf32>,
    return
  }
  func.func @transform_0(%arg0: i32) -> (i32, i32) {
    %c0_i32 = arith.constant 0 : i32
    %c0_i32_0 = arith.constant 0 : i32
    return %arg0, %c0_i32 : i32, i32
  }
  func.func @transform_1(%arg0: i32) -> (i32, i32) {
    %c0_i32 = arith.constant 0 : i32
    %c0_i32_0 = arith.constant 0 : i32
    %c0_i32_1 = arith.constant 0 : i32
    return %c0_i32, %c0_i32_0 : i32, i32
  }
  func.func @transform_2(%arg0: i32) -> (i32, i32) {
    %c0_i32 = arith.constant 0 : i32
    %c0_i32_0 = arith.constant 0 : i32
    %c0_i32_1 = arith.constant 0 : i32
    return %c0_i32, %c0_i32_0 : i32, i32
  }
  func.func @transform_3(%arg0: i32) -> (i32, i32) {
    %c0_i32 = arith.constant 0 : i32
    %c0_i32_0 = arith.constant 0 : i32
    %c0_i32_1 = arith.constant 0 : i32
    return %c0_i32, %c0_i32_0 : i32, i32
  }
}

</mosaic_0001>

<llo_original>
// kernel: tpu_custom_call.1
$region0: #{tpu_custom_call.1}
  #allocation0 [shape = 'u32[]', space=smem, size = 0x4, offset = 0x4, fixed_abs, tag = 'smem constant byte address 0x4 - core index']
  #allocation1 [shape = 'u32[144,128]{1,0:T(1,128)}', space=vmem, size = 0x12000, scoped, tag = 'internal scratch']
  %s0 = inlined_call_operand.vmem [shape: f32[256,10], index: 0, kind: input, shape index: {}]
  %s1 = inlined_call_operand.vmem [shape: f32[10,128], index: 1, kind: input, shape index: {}]
  %s2 = inlined_call_operand.hbm [shape: f32[1,128], index: 2, kind: output, shape index: {0}]
  %s3 = inlined_call_operand.hbm [shape: f32[1,128], index: 3, kind: output, shape index: {1}]
  %4 = xla_tuple %s2, %s3
  %s5 = sld [smem:[#allocation0]]
  $region53: #{tpu_custom_call.1} parent=0
    _
  %s7 = ssub.s32 1, %s5
  %s8 = scalar_select 0, %s7, %s5
  $region1: #{tpu_custom_call.1} parent=0
    #allocation2 [shape = 'u8[512]{0}', space=vmem, size = 0x400, scoped, tag = 'output window, operand 0, single buffered']
    #allocation3 [shape = 's32[2]{0}', space=sflag, size = 0x8, scoped, tag = 'scoped memory for tpu_custom_call.1']
    #allocation4 [shape = 'u8[512]{0}', space=vmem, size = 0x400, scoped, tag = 'output window, operand 1, single buffered']
    #allocation5 [shape = 's32[1]{0}', space=sflag, size = 0x4, scoped, tag = 'scoped memory for tpu_custom_call.1']
    %9 = vsyncpa [#allocation3], 0
    %10 = vsyncpa [#allocation5], 0
    loop: start=0, step=1, limit=4
    $region2: #{tpu_custom_call.1} parent=1 // loop_pre_header
      _
    $region3: #{tpu_custom_call.1} parent=1 // loop_header
      %s12 = sphi 0, %s16
      %p13 = scmp.ge.s32.totalorder %s12, 4
      %s22 = sphi 0, %s24
      %s25 = sphi 0, %s22
      %s26 = sphi 0, %s25
      %s42 = sphi 0, %s26
      %s46 = sphi 0, %s46
      %s48 = sphi 0, %s46
      %s49 = sphi 0, %s48
      %s63 = sphi 0, %s49
      %s67 = sphi 0, %s67
      %s69 = sphi 0, %s67
      %s70 = sphi 0, %s69
      %s84 = sphi 0, %s70
      %s88 = sphi 0, %s88
      %s90 = sphi 0, %s88
      %s91 = sphi 0, %s90
      %s105 = sphi 0, %s91
    $region4: #{tpu_custom_call.1} parent=1 // loop_header_branch
      %15 = sbr.rel (%p13) target = $region8
    $region5: #{tpu_custom_call.1} parent=1 // loop_body
      %s17 = ssub.s32 %s12, 1
      %s18 = ssub.s32 %s12, 2
      %s19 = sadd.s32 %s12, 1
      %s20 = ssub.s32 %s12, %s19
      %p21 = scmp.eq.s32.totalorder %s20, 0
      %s23 = sadd.s32 %s22, 1
      %s24 = scalar_select %p21, %s22, %s23
      %p27 = pneg %p21
      %p28 = scmp.eq.s32.totalorder %s12, 1
      %p29 = por %p27, %p28
      %p30 = scmp.ne.s32.totalorder %s22, %s25
      %p31 = scmp.eq.s32.totalorder %s12, 0
      %p32 = por %p30, %p31
      %p33 = scmp.ne.s32.totalorder %s22, %s25
      %p34 = scmp.eq.s32.totalorder %s17, 1
      %p35 = por %p33, %p34
      %p36 = scmp.ne.s32.totalorder %s25, %s26
      %p37 = scmp.eq.s32.totalorder %s17, 0
      %p38 = por %p36, %p37
      %p39 = scmp.ne.s32.totalorder %s25, %s26
      %p40 = scmp.eq.s32.totalorder %s18, 1
      %p41 = por %p39, %p40
      %p43 = scmp.ne.s32.totalorder %s26, %s42
      %p44 = scmp.eq.s32.totalorder %s18, 0
      %p45 = por %p43, %p44
      %s47 = sadd.s32 %s46, 1
      %p50 = scmp.eq.s32.totalorder %s12, 1
      %p51 = scmp.ne.s32.totalorder %s46, %s48
      %p52 = scmp.eq.s32.totalorder %s12, 0
      %p53 = por %p51, %p52
      %p54 = scmp.ne.s32.totalorder %s46, %s48
      %p55 = scmp.eq.s32.totalorder %s17, 1
      %p56 = por %p54, %p55
      %p57 = scmp.ne.s32.totalorder %s48, %s49
      %p58 = scmp.eq.s32.totalorder %s17, 0
      %p59 = por %p57, %p58
      %p60 = scmp.ne.s32.totalorder %s48, %s49
      %p61 = scmp.eq.s32.totalorder %s18, 1
      %p62 = por %p60, %p61
      %p64 = scmp.ne.s32.totalorder %s49, %s63
      %p65 = scmp.eq.s32.totalorder %s18, 0
      %p66 = por %p64, %p65
      %s68 = sadd.s32 %s67, 1
      %p71 = scmp.eq.s32.totalorder %s12, 1
      %p72 = scmp.ne.s32.totalorder %s67, %s69
      %p73 = scmp.eq.s32.totalorder %s12, 0
      %p74 = por %p72, %p73
      %p75 = scmp.ne.s32.totalorder %s67, %s69
      %p76 = scmp.eq.s32.totalorder %s17, 1
      %p77 = por %p75, %p76
      %p78 = scmp.ne.s32.totalorder %s69, %s70
      %p79 = scmp.eq.s32.totalorder %s17, 0
      %p80 = por %p78, %p79
      %p81 = scmp.ne.s32.totalorder %s69, %s70
      %p82 = scmp.eq.s32.totalorder %s18, 1
      %p83 = por %p81, %p82
      %p85 = scmp.ne.s32.totalorder %s70, %s84
      %p86 = scmp.eq.s32.totalorder %s18, 0
      %p87 = por %p85, %p86
      %s89 = sadd.s32 %s88, 1
      %p92 = scmp.eq.s32.totalorder %s12, 1
      %p93 = scmp.ne.s32.totalorder %s88, %s90
      %p94 = scmp.eq.s32.totalorder %s12, 0
      %p95 = por %p93, %p94
      %p96 = scmp.ne.s32.totalorder %s88, %s90
      %p97 = scmp.eq.s32.totalorder %s17, 1
      %p98 = por %p96, %p97
      %p99 = scmp.ne.s32.totalorder %s90, %s91
      %p100 = scmp.eq.s32.totalorder %s17, 0
      %p101 = por %p99, %p100
      %p102 = scmp.ne.s32.totalorder %s90, %s91
      %p103 = scmp.eq.s32.totalorder %s18, 1
      %p104 = por %p102, %p103
      %p106 = scmp.ne.s32.totalorder %s91, %s105
      %p107 = scmp.eq.s32.totalorder %s18, 0
      %p108 = por %p106, %p107
      %p109 = scmp.le.s32.totalorder 1, %s12
      %p110 = scmp.lt.s32.totalorder %s12, 3
      %p111 = pnand %p109, %p110
      %p112 = pneg %p111
      // Predicated region
      $region9: #{tpu_custom_call.1} parent=5 // pred_check
        _
      $region10: #{tpu_custom_call.1} parent=5 // pred_check_branch
        %114 = sbr.rel (%p111) target = $region12
      $region11: #{tpu_custom_call.1} parent=5 // pred_region
        %s115 = ssub.s32 %s12, 1
        // Predicated region
        $region13: #{tpu_custom_call.1} parent=11 // pred_check
          %p116 = pneg %p59
        $region14: #{tpu_custom_call.1} parent=11 // pred_check_branch
          %118 = sbr.rel (%p116) target = $region16
        $region15: #{tpu_custom_call.1} parent=11 // pred_region
          _
        $region16: #{tpu_custom_call.1} parent=11 // pred_fallthru
          _
      $region12: #{tpu_custom_call.1} parent=5 // pred_fallthru
        _
      %p119 = scmp.lt.s32.totalorder %s12, 2
      // Predicated region
      $region17: #{tpu_custom_call.1} parent=5 // pred_check
        %p120 = pneg %p119
      $region18: #{tpu_custom_call.1} parent=5 // pred_check_branch
        %122 = sbr.rel (%p120) target = $region20
      $region19: #{tpu_custom_call.1} parent=5 // pred_region
        // Predicated region
        $region21: #{tpu_custom_call.1} parent=19 // pred_check
          %p123 = pneg %p32
        $region22: #{tpu_custom_call.1} parent=19 // pred_check_branch
          %125 = sbr.rel (%p123) target = $region24
        $region23: #{tpu_custom_call.1} parent=19 // pred_region
          %s126 = smul.u32 16, %s12
          %p127 = scmp.lt.s32.totalorder %s126, 31
          %s128 = scalar_select %p127, %s126, 31
          %s129 = smul.addr %s128, 8
          %s130 = scalar_lea.vmem %s0, %s129
          %s131 = smul.u32 16, %s12
        $region24: #{tpu_custom_call.1} parent=19 // pred_fallthru
          _
      $region20: #{tpu_custom_call.1} parent=5 // pred_fallthru
        _
      %p132 = scmp.le.s32.totalorder 1, %s12
      %p133 = scmp.lt.s32.totalorder %s12, 3
      %p134 = pnand %p132, %p133
      %p135 = pneg %p134
      // Predicated region
      $region25: #{tpu_custom_call.1} parent=5 // pred_check
        _
      $region26: #{tpu_custom_call.1} parent=5 // pred_check_branch
        %137 = sbr.rel (%p134) target = $region28
      $region27: #{tpu_custom_call.1} parent=5 // pred_region
        %s138 = ssub.s32 %s12, 1
        %s139 = smul.u32 16, %s17
        %p140 = scmp.lt.s32.totalorder %s139, 31
        %s141 = scalar_select %p140, %s139, 31
        %s142 = smul.addr %s141, 8
        %s143 = scalar_lea.vmem %s0, %s142
        %p144 = pneg %p38
        %p145 = pneg %p35
        %p146 = pneg %p59
        %p147 = pneg %p56
        %p148 = pneg %p80
        %p149 = pneg %p77
        %p150 = pneg %p101
        %p151 = pneg %p98
        %s152 = smul.u32 16, %s17
        %p153 = scmp.lt.s32.totalorder %s152, 31
        %s154 = scalar_select %p153, %s152, 31
        %s155 = smul.addr %s154, 8
        %s156 = scalar_lea.vmem %s0, %s155
        %s157 = smul.u32 16, %s17
        %p158 = scmp.eq.s32.totalorder %s17, 0
        // Predicated region
        $region29: #{tpu_custom_call.1} parent=27 // pred_check
          %p159 = pneg %p158
        $region30: #{tpu_custom_call.1} parent=27 // pred_check_branch
          %161 = sbr.rel (%p159) target = $region32
        $region31: #{tpu_custom_call.1} parent=27 // pred_region
          %162 = vst [vmem:[#allocation2] sm:$0x1] 0.0
          %163 = vst [vmem:[#allocation4] sm:$0x1] 0.0
        $region32: #{tpu_custom_call.1} parent=27 // pred_fallthru
          _
        %v164 = vld [vmem:[%s156] sm:$0xff]
        %v165 = vld [vmem:[%s156 + $0x8] sm:$0xff]
        %v166 = vld [vmem:[%s156 + $0x10] sm:$0xff]
        %v167 = vld [vmem:[%s156 + $0x18] sm:$0xff]
        %v168 = vld [vmem:[%s156 + $0x20] sm:$0xff]
        %v169 = vld [vmem:[%s156 + $0x28] sm:$0xff]
        %v170 = vld [vmem:[%s156 + $0x30] sm:$0xff]
        %v171 = vld [vmem:[%s156 + $0x38] sm:$0xff]
        %v172 = vld [vmem:[%s156 + $0x40] sm:$0xff]
        %v173 = vld [vmem:[%s156 + $0x48] sm:$0xff]
        %v174 = vld [vmem:[%s156 + $0x50] sm:$0xff]
        %v175 = vld [vmem:[%s156 + $0x58] sm:$0xff]
        %v176 = vld [vmem:[%s156 + $0x60] sm:$0xff]
        %v177 = vld [vmem:[%s156 + $0x68] sm:$0xff]
        %v178 = vld [vmem:[%s156 + $0x70] sm:$0xff]
        %v179 = vld [vmem:[%s156 + $0x78] sm:$0xff]
        %v180 = vld [vmem:[%s1] sm:$0xff]
        %v181 = vld [vmem:[%s1 + $0x8] sm:$0x3]
        %vm182 = vcmask 80896
        %v184 = vsel %vm182, %v164, 0
        %v187 = vsel %vm182, %v165, 0
        %v190 = vsel %vm182, %v166, 0
        %v193 = vsel %vm182, %v167, 0
        %v196 = vsel %vm182, %v168, 0
        %v199 = vsel %vm182, %v169, 0
        %v202 = vsel %vm182, %v170, 0
        %v205 = vsel %vm182, %v171, 0
        %v208 = vsel %vm182, %v172, 0
        %v211 = vsel %vm182, %v173, 0
        %v214 = vsel %vm182, %v174, 0
        %v217 = vsel %vm182, %v175, 0
        %v220 = vsel %vm182, %v176, 0
        %v223 = vsel %vm182, %v177, 0
        %v226 = vsel %vm182, %v178, 0
        %v229 = vsel %vm182, %v179, 0
        %vm231 = vcmask 1041408
        %v233 = vsel %vm231, %v181, 0
        %235 = vmatprep.subr.mxu0 0.0
        %236 = vmatpush1.msra.mxu0 %v180
        %237 = vmatprep.subr.mxu0 0.0
        %238 = vmatpush1.msra.mxu0 %v233
        %239 = vmatprep.subr.mxu0 0.0
        %240 = vmatpush1.msra.mxu0 0.0
        %241 = vmatprep.subr.mxu0 0.0
        %242 = vmatpush1.msra.mxu0 0.0
        %243 = vmatprep.subr.mxu0 0.0
        %244 = vmatpush1.msra.mxu0 0.0
        %245 = vmatprep.subr.mxu0 0.0
        %246 = vmatpush1.msra.mxu0 0.0
        %247 = vmatprep.subr.mxu0 0.0
        %248 = vmatpush1.msra.mxu0 0.0
        %249 = vmatprep.subr.mxu0 0.0
        %250 = vmatpush1.msra.mxu0 0.0
        %251 = vmatprep.subr.mxu0 0.0
        %252 = vmatpush1.msra.mxu0 0.0
        %253 = vmatprep.subr.mxu0 0.0
        %254 = vmatpush1.msra.mxu0 0.0
        %255 = vmatprep.subr.mxu0 0.0
        %256 = vmatpush1.msra.mxu0 0.0
        %257 = vmatprep.subr.mxu0 0.0
        %258 = vmatpush1.msra.mxu0 0.0
        %259 = vmatprep.subr.mxu0 0.0
        %260 = vmatpush1.msra.mxu0 0.0
        %261 = vmatprep.subr.mxu0 0.0
        %262 = vmatpush1.msra.mxu0 0.0
        %263 = vmatprep.subr.mxu0 0.0
        %264 = vmatpush1.msra.mxu0 0.0
        %265 = vmatprep.subr.mxu0 0.0
        %266 = vmatpush1.msra.mxu0 0.0
        %267 = vmatprep.subr.mxu0 0.0
        %268 = vmatpush1.msra.mxu0 0.0
        %269 = vmatprep.subr.mxu0 0.0
        %270 = vmatpush1.msra.mxu0 0.0
        %271 = vmatprep.subr.mxu0 0.0
        %272 = vmatpush1.msra.mxu0 0.0
        %273 = vmatprep.subr.mxu0 0.0
        %274 = vmatpush1.msra.mxu0 0.0
        %275 = vmatprep.subr.mxu0 0.0
        %276 = vmatpush1.msra.mxu0 0.0
        %277 = vmatprep.subr.mxu0 0.0
        %278 = vmatpush1.msra.mxu0 0.0
        %279 = vmatprep.subr.mxu0 0.0
        %280 = vmatpush1.msra.mxu0 0.0
        %281 = vmatprep.subr.mxu0 0.0
        %282 = vmatpush1.msra.mxu0 0.0
        %283 = vmatprep.subr.mxu0 0.0
        %284 = vmatpush1.msra.mxu0 0.0
        %285 = vmatprep.subr.mxu0 0.0
        %286 = vmatpush1.msra.mxu0 0.0
        %287 = vmatprep.subr.mxu0 0.0
        %288 = vmatpush1.msra.mxu0 0.0
        %289 = vmatprep.subr.mxu0 0.0
        %290 = vmatpush1.msra.mxu0 0.0
        %291 = vmatprep.subr.mxu0 0.0
        %292 = vmatpush1.msra.mxu0 0.0
        %293 = vmatprep.subr.mxu0 0.0
        %294 = vmatpush1.msra.mxu0 0.0
        %295 = vmatprep.subr.mxu0 0.0
        %296 = vmatpush1.msra.mxu0 0.0
        %297 = vmatprep.subr.mxu0 0.0
        %298 = vmatpush1.msra.mxu0 0.0
        %299 = vmatprep.mubr.f32.mxu0 0.0
        %300 = vmatmul.mubr.f32.gmra.mrb[0].mxu0 %v184
        %v301 = vpop.f32.mrb[0].mxu0
        %v302 = vadd.f32 0.0, %v301
        %v303 = vpop.f32.mrb[0].mxu0
        %304 = vmatprep.mubr.f32.mxu0 0.0
        %305 = vmatmul.mubr.f32.gmra.mrb[0].mxu0 %v187
        %v306 = vpop.f32.mrb[0].mxu0
        %v307 = vadd.f32 0.0, %v306
        %v308 = vpop.f32.mrb[0].mxu0
        %309 = vmatprep.mubr.f32.mxu0 0.0
        %310 = vmatmul.mubr.f32.gmra.mrb[0].mxu0 %v190
        %v311 = vpop.f32.mrb[0].mxu0
        %v312 = vadd.f32 0.0, %v311
        %v313 = vpop.f32.mrb[0].mxu0
        %314 = vmatprep.mubr.f32.mxu0 0.0
        %315 = vmatmul.mubr.f32.gmra.mrb[0].mxu0 %v193
        %v316 = vpop.f32.mrb[0].mxu0
        %v317 = vadd.f32 0.0, %v316
        %v318 = vpop.f32.mrb[0].mxu0
        %319 = vmatprep.mubr.f32.mxu0 0.0
        %320 = vmatmul.mubr.f32.gmra.mrb[0].mxu0 %v196
        %v321 = vpop.f32.mrb[0].mxu0
        %v322 = vadd.f32 0.0, %v321
        %v323 = vpop.f32.mrb[0].mxu0
        %324 = vmatprep.mubr.f32.mxu0 0.0
        %325 = vmatmul.mubr.f32.gmra.mrb[0].mxu0 %v199
        %v326 = vpop.f32.mrb[0].mxu0
        %v327 = vadd.f32 0.0, %v326
        %v328 = vpop.f32.mrb[0].mxu0
        %329 = vmatprep.mubr.f32.mxu0 0.0
        %330 = vmatmul.mubr.f32.gmra.mrb[0].mxu0 %v202
        %v331 = vpop.f32.mrb[0].mxu0
        %v332 = vadd.f32 0.0, %v331
        %v333 = vpop.f32.mrb[0].mxu0
        %334 = vmatprep.mubr.f32.mxu0 0.0
        %335 = vmatmul.mubr.f32.gmra.mrb[0].mxu0 %v205
        %v336 = vpop.f32.mrb[0].mxu0
        %v337 = vadd.f32 0.0, %v336
        %v338 = vpop.f32.mrb[0].mxu0
        %339 = vmatprep.mubr.f32.mxu0 0.0
        %340 = vmatmul.mubr.f32.gmra.mrb[0].mxu0 %v208
        %v341 = vpop.f32.mrb[0].mxu0
        %v342 = vadd.f32 0.0, %v341
        %v343 = vpop.f32.mrb[0].mxu0
        %344 = vmatprep.mubr.f32.mxu0 0.0
        %345 = vmatmul.mubr.f32.gmra.mrb[0].mxu0 %v211
        %v346 = vpop.f32.mrb[0].mxu0
        %v347 = vadd.f32 0.0, %v346
        %v348 = vpop.f32.mrb[0].mxu0
        %349 = vmatprep.mubr.f32.mxu0 0.0
        %350 = vmatmul.mubr.f32.gmra.mrb[0].mxu0 %v214
        %v351 = vpop.f32.mrb[0].mxu0
        %v352 = vadd.f32 0.0, %v351
        %v353 = vpop.f32.mrb[0].mxu0
        %354 = vmatprep.mubr.f32.mxu0 0.0
        %355 = vmatmul.mubr.f32.gmra.mrb[0].mxu0 %v217
        %v356 = vpop.f32.mrb[0].mxu0
        %v357 = vadd.f32 0.0, %v356
        %v358 = vpop.f32.mrb[0].mxu0
        %359 = vmatprep.mubr.f32.mxu0 0.0
        %360 = vmatmul.mubr.f32.gmra.mrb[0].mxu0 %v220
        %v361 = vpop.f32.mrb[0].mxu0
        %v362 = vadd.f32 0.0, %v361
        %v363 = vpop.f32.mrb[0].mxu0
        %364 = vmatprep.mubr.f32.mxu0 0.0
        %365 = vmatmul.mubr.f32.gmra.mrb[0].mxu0 %v223
        %v366 = vpop.f32.mrb[0].mxu0
        %v367 = vadd.f32 0.0, %v366
        %v368 = vpop.f32.mrb[0].mxu0
        %369 = vmatprep.mubr.f32.mxu0 0.0
        %370 = vmatmul.mubr.f32.gmra.mrb[0].mxu0 %v226
        %v371 = vpop.f32.mrb[0].mxu0
        %v372 = vadd.f32 0.0, %v371
        %v373 = vpop.f32.mrb[0].mxu0
        %374 = vmatprep.mubr.f32.mxu0 0.0
        %375 = vmatmul.mubr.f32.gmra.mrb[0].mxu0 %v229
        %v376 = vpop.f32.mrb[0].mxu0
        %v377 = vadd.f32 0.0, %v376
        %v378 = vpop.f32.mrb[0].mxu0
        %379 = vdwg.mxu0
        %v380 = vld [vmem:[#allocation2] sm:$0x1]
        %v381 = vadd.f32 %v302, %v307
        %v382 = vadd.f32 %v381, %v312
        %v383 = vadd.f32 %v382, %v317
        %v384 = vadd.f32 %v383, %v322
        %v385 = vadd.f32 %v384, %v327
        %v386 = vadd.f32 %v385, %v332
        %v387 = vadd.f32 %v386, %v337
        %v388 = vadd.f32 %v387, %v342
        %v389 = vadd.f32 %v388, %v347
        %v390 = vadd.f32 %v389, %v352
        %v391 = vadd.f32 %v390, %v357
        %v392 = vadd.f32 %v391, %v362
        %v393 = vadd.f32 %v392, %v367
        %v394 = vadd.f32 %v393, %v372
        %v395 = vadd.f32 %v394, %v377
        %v396 = vrot.slane %v395, 4
        %v397 = vadd.f32 %v395, %v396
        %v398 = vrot.slane %v397, 2
        %v399 = vadd.f32 %v397, %v398
        %v400 = vrot.slane %v399, 1
        %v401 = vadd.f32 %v399, %v400
        %v402 = vadd.f32 %v380, %v401
        %403 = vst [vmem:[#allocation2] sm:$0x1] %v402
        %v404 = vld [vmem:[#allocation4] sm:$0x1]
        %v405 = vmul.f32 %v302, %v302
        %v406 = vmul.f32 %v307, %v307
        %v407 = vmul.f32 %v312, %v312
        %v408 = vmul.f32 %v317, %v317
        %v409 = vmul.f32 %v322, %v322
        %v410 = vmul.f32 %v327, %v327
        %v411 = vmul.f32 %v332, %v332
        %v412 = vmul.f32 %v337, %v337
        %v413 = vmul.f32 %v342, %v342
        %v414 = vmul.f32 %v347, %v347
        %v415 = vmul.f32 %v352, %v352
        %v416 = vmul.f32 %v357, %v357
        %v417 = vmul.f32 %v362, %v362
        %v418 = vmul.f32 %v367, %v367
        %v419 = vmul.f32 %v372, %v372
        %v420 = vmul.f32 %v377, %v377
        %v421 = vadd.f32 %v405, %v406
        %v422 = vadd.f32 %v421, %v407
        %v423 = vadd.f32 %v422, %v408
        %v424 = vadd.f32 %v423, %v409
        %v425 = vadd.f32 %v424, %v410
        %v426 = vadd.f32 %v425, %v411
        %v427 = vadd.f32 %v426, %v412
        %v428 = vadd.f32 %v427, %v413
        %v429 = vadd.f32 %v428, %v414
        %v430 = vadd.f32 %v429, %v415
        %v431 = vadd.f32 %v430, %v416
        %v432 = vadd.f32 %v431, %v417
        %v433 = vadd.f32 %v432, %v418
        %v434 = vadd.f32 %v433, %v419
        %v435 = vadd.f32 %v434, %v420
        %v436 = vrot.slane %v435, 4
        %v437 = vadd.f32 %v435, %v436
        %v438 = vrot.slane %v437, 2
        %v439 = vadd.f32 %v437, %v438
        %v440 = vrot.slane %v439, 1
        %v441 = vadd.f32 %v439, %v440
        %v442 = vadd.f32 %v404, %v441
        %443 = vst [vmem:[#allocation4] sm:$0x1] %v442
        // Predicated region
        $region33: #{tpu_custom_call.1} parent=27 // pred_check
          %p444 = pneg %p77
        $region34: #{tpu_custom_call.1} parent=27 // pred_check_branch
          %446 = sbr.rel (%p444) target = $region36
        $region35: #{tpu_custom_call.1} parent=27 // pred_region
          %s448 = ssub.s32 16, 16
          %449 = vsyncadd [#allocation3], %s448
          %s451 = sshll.u32 [#allocation2], 4
          %s452 = int_to_ptr.vmem [resolvable:$true] %s451
          %454 = dma.vmem_to_hbm [thread:$0]  %s452, 16, %s2, [#allocation3]
        $region36: #{tpu_custom_call.1} parent=27 // pred_fallthru
          _
        // Predicated region
        $region37: #{tpu_custom_call.1} parent=27 // pred_check
          %p455 = pneg %p98
        $region38: #{tpu_custom_call.1} parent=27 // pred_check_branch
          %457 = sbr.rel (%p455) target = $region40
        $region39: #{tpu_custom_call.1} parent=27 // pred_region
          %s459 = ssub.s32 16, 16
          %460 = vsyncadd [#allocation5], %s459
          %s462 = sshll.u32 [#allocation4], 4
          %s463 = int_to_ptr.vmem [resolvable:$true] %s462
          %465 = dma.vmem_to_hbm [thread:$0]  %s463, 16, %s3, [#allocation5]
        $region40: #{tpu_custom_call.1} parent=27 // pred_fallthru
          _
        // Predicated region
        $region41: #{tpu_custom_call.1} parent=27 // pred_check
          %p466 = pneg %p77
        $region42: #{tpu_custom_call.1} parent=27 // pred_check_branch
          %468 = sbr.rel (%p466) target = $region44
        $region43: #{tpu_custom_call.1} parent=27 // pred_region
          %469 = dma.done [#allocation3], 16
        $region44: #{tpu_custom_call.1} parent=27 // pred_fallthru
          _
        // Predicated region
        $region45: #{tpu_custom_call.1} parent=27 // pred_check
          %p470 = pneg %p98
        $region46: #{tpu_custom_call.1} parent=27 // pred_check_branch
          %472 = sbr.rel (%p470) target = $region48
        $region47: #{tpu_custom_call.1} parent=27 // pred_region
          %473 = dma.done [#allocation5], 16
        $region48: #{tpu_custom_call.1} parent=27 // pred_fallthru
          _
      $region28: #{tpu_custom_call.1} parent=5 // pred_fallthru
        _
      %p474 = scmp.le.s32.totalorder 2, %s12
      // Predicated region
      $region49: #{tpu_custom_call.1} parent=5 // pred_check
        %p475 = pneg %p474
      $region50: #{tpu_custom_call.1} parent=5 // pred_check_branch
        %477 = sbr.rel (%p475) target = $region52
      $region51: #{tpu_custom_call.1} parent=5 // pred_region
        %s478 = ssub.s32 %s12, 2
      $region52: #{tpu_custom_call.1} parent=5 // pred_fallthru
        _
    $region6: #{tpu_custom_call.1} parent=1 // loop_footer
      %s16 = sadd.s32 1, %s12
    $region7: #{tpu_custom_call.1} parent=1 // loop_footer_branch
      %11 = sbr.rel target = $region3
    $region8: #{tpu_custom_call.1} parent=1 // loop_exit
      _
    %479 = vsyncpa [#allocation3], 1
    %s480 = scalar_lea.sflag [#allocation3], 1
    %481 = vsyncpa %s480, 1
    %482 = vsyncpa [#allocation5], 1

</llo_original>
